<compile_context>
chip_gen: v6e
topology: v6e:2x2x1
jax: 0.10.0
libtpu: 0.0.40
codegen_flags: <defaults>
</compile_context>

<pallas_src>
import functools

import jax
import jax.numpy as jnp
from jax.experimental import pallas as pl
from jax.experimental.pallas import tpu as pltpu

HIDDEN = 32       # per-head hidden width (matches the PyTorch module)
WIDE = 128        # fused lane width: [actor 0:32 | critic 32:64 | zero pad]
BIAS_ROWS = 8     # bias rows appended to the param slab (3 used, padded to 8)


def _round_up(v: int, m: int) -> int:
    return (v + m - 1) // m * m


def _aac_kernel(x_ref, p_ref, out_ref):
    """x_ref: (tile, F) f32; p_ref: (F_pad + 2*WIDE + BIAS_ROWS, WIDE) f32;
    out_ref: (tile, OUT_PAD) f32 with OUT_PAD = round_up(out_actions + 1, 8)."""
    f = x_ref.shape[1]
    f_pad = p_ref.shape[0] - 2 * WIDE - BIAS_ROWS

    # Fused pad-free cast: x enters as f32 and is narrowed to bf16 on the VPU.
    x = x_ref[...].astype(jnp.bfloat16)

    # Static, 8-aligned slices into the resident param slab (no runtime cost).
    w1 = p_ref[0:f, :].astype(jnp.bfloat16)                     # (F, WIDE)  [aw1 | cw1 | 0]
    w2 = p_ref[f_pad:f_pad + WIDE, :].astype(jnp.bfloat16)      # (WIDE, WIDE) blockdiag(aw2, cw2)
    w3 = p_ref[f_pad + WIDE:f_pad + 2 * WIDE, :].astype(jnp.bfloat16)
    boff = f_pad + 2 * WIDE
    b1 = p_ref[boff + 0:boff + 1, :]                            # (1, WIDE) f32
    b2 = p_ref[boff + 1:boff + 2, :]
    b3 = p_ref[boff + 2:boff + 3, :]

    # Fused actor+critic forward: 3 bf16 MXU matmuls, f32 accumulation/bias.
    h = jnp.maximum(jnp.dot(x, w1, preferred_element_type=jnp.float32) + b1, 0.0)
    h = jnp.maximum(jnp.dot(h.astype(jnp.bfloat16), w2,
                            preferred_element_type=jnp.float32) + b2, 0.0)
    out = jnp.dot(h.astype(jnp.bfloat16), w3,
                  preferred_element_type=jnp.float32) + b3      # (tile, WIDE)

    # Only the first out_actions+1 lanes are meaningful -> 16x less writeback.
    out_ref[...] = out[:, :out_ref.shape[1]]


@functools.partial(jax.jit, static_argnames=("out_actions", "tile_n"))
def aac_policy_net_forward(x, p_slab, *, out_actions, tile_n=2048):
    """Pallas forward. x: (N, F) f32. Returns (act (N, A) f32, val (N, 1) f32)."""
    n, f = x.shape
    out_w = _round_up(out_actions + 1, 8)

    # Batch tile: multiple of 8 (f32 sublane tile), large by default so grid-step
    # overhead is amortized; capped by the batch itself.
    tile = _round_up(min(int(tile_n), max(n, 8)), 8)
    # v7x has 2 TensorCores: make the ("parallel",) grid have >=2 steps when
    # there is enough work so both cores are used.
    if n >= 256 and pl.cdiv(n, tile) < 2:
        tile = _round_up(pl.cdiv(n, 2), 8)

    grid = pl.cdiv(n, tile)
    n_pad = grid * tile   # output rows fully covered by blocks (no OOB stores)

    out = pl.pallas_call(
        _aac_kernel,
        out_shape=jax.ShapeDtypeStruct((n_pad, out_w), jnp.float32),
        grid=(grid,),
        in_specs=[
            # Batch-tiled input; ragged last block reads undefined rows, which is
            # safe because every output row depends only on its own input row.
            pl.BlockSpec((tile, f), lambda i: (i, 0)),
            # Single fused param slab, resident across all grid steps.
            pl.BlockSpec(p_slab.shape, lambda i: (0, 0)),
        ],
        out_specs=pl.BlockSpec((tile, out_w), lambda i: (i, 0)),
        compiler_params=pltpu.CompilerParams(
            dimension_semantics=("parallel",)),
    )(x, p_slab)

    act = out[:n, :out_actions]
    val = out[:n, out_actions:out_actions + 1]
    return act, val


def init_params(key, in_features, out_actions):
    """Deterministic init, PyTorch nn.Linear convention, stored as (in, out)/(1, out)."""
    keys = jax.random.split(key, 12)

    def linear(kw, kb, fan_in, fan_out):
        bound = 1.0 / jnp.sqrt(jnp.float32(fan_in))
        w_pt = jax.random.uniform(kw, (fan_out, fan_in), jnp.float32, -bound, bound)
        b = jax.random.uniform(kb, (1, fan_out), jnp.float32, -bound, bound)
        return w_pt.T, b

    aw1, ab1 = linear(keys[0], keys[1], in_features, HIDDEN)
    aw2, ab2 = linear(keys[2], keys[3], HIDDEN, HIDDEN)
    aw3, ab3 = linear(keys[4], keys[5], HIDDEN, out_actions)
    cw1, cb1 = linear(keys[6], keys[7], in_features, HIDDEN)
    cw2, cb2 = linear(keys[8], keys[9], HIDDEN, HIDDEN)
    cw3, cb3 = linear(keys[10], keys[11], HIDDEN, 1)
    return dict(aw1=aw1, ab1=ab1, aw2=aw2, ab2=ab2, aw3=aw3, ab3=ab3,
                cw1=cw1, cb1=cb1, cw2=cw2, cb2=cb2, cw3=cw3, cb3=cb3)


def pack_params(params, in_features, out_actions):
    """Fuse actor/critic weights into 3 wide matrices + bias rows -> one f32 slab."""
    assert 2 * HIDDEN <= WIDE and out_actions + 1 <= WIDE
    f_pad = _round_up(in_features, 8)                 # 8-aligned row offsets (f32 sublane tile)
    rows = f_pad + 2 * WIDE + BIAS_ROWS
    slab = jnp.zeros((rows, WIDE), jnp.float32)

    # Layer 1: [actor | critic | zero pad] columns.
    slab = slab.at[:in_features, :HIDDEN].set(params["aw1"])
    slab = slab.at[:in_features, HIDDEN:2 * HIDDEN].set(params["cw1"])
    # Layer 2: block-diagonal(aw2, cw2).
    r2 = f_pad
    slab = slab.at[r2:r2 + HIDDEN, :HIDDEN].set(params["aw2"])
    slab = slab.at[r2 + HIDDEN:r2 + 2 * HIDDEN, HIDDEN:2 * HIDDEN].set(params["cw2"])
    # Layer 3: actor -> cols [0:A], critic -> col A.
    r3 = f_pad + WIDE
    slab = slab.at[r3:r3 + HIDDEN, :out_actions].set(params["aw3"])
    slab = slab.at[r3 + HIDDEN:r3 + 2 * HIDDEN, out_actions:out_actions + 1].set(params["cw3"])
    # Bias rows.
    boff = f_pad + 2 * WIDE
    slab = slab.at[boff + 0, :HIDDEN].set(params["ab1"][0])
    slab = slab.at[boff + 0, HIDDEN:2 * HIDDEN].set(params["cb1"][0])
    slab = slab.at[boff + 1, :HIDDEN].set(params["ab2"][0])
    slab = slab.at[boff + 1, HIDDEN:2 * HIDDEN].set(params["cb2"][0])
    slab = slab.at[boff + 2, :out_actions].set(params["ab3"][0])
    slab = slab.at[boff + 2, out_actions:out_actions + 1].set(params["cb3"][0])
    return slab


def reference_forward_f32(x, params):
    """Pure-f32 JAX reference matching the original PyTorch module semantics."""
    h = jnp.maximum(x @ params["aw1"] + params["ab1"], 0.0)
    h = jnp.maximum(h @ params["aw2"] + params["ab2"], 0.0)
    act = h @ params["aw3"] + params["ab3"]
    g = jnp.maximum(x @ params["cw1"] + params["cb1"], 0.0)
    g = jnp.maximum(g @ params["cw2"] + params["cb2"], 0.0)
    val = g @ params["cw3"] + params["cb3"]
    return act, val


def reference_forward_bf16(x, params):
    """Precision-matched reference: same bf16-operand / f32-accumulate math as the kernel."""
    bf = jnp.bfloat16

    def lin(a, w, b):
        return jnp.dot(a.astype(bf), w.astype(bf),
                       preferred_element_type=jnp.float32) + b

    h = jnp.maximum(lin(x, params["aw1"], params["ab1"]), 0.0)
    h = jnp.maximum(lin(h, params["aw2"], params["ab2"]), 0.0)
    act = lin(h, params["aw3"], params["ab3"])
    g = jnp.maximum(lin(x, params["cw1"], params["cb1"]), 0.0)
    g = jnp.maximum(lin(g, params["cw2"], params["cb2"]), 0.0)
    val = lin(g, params["cw3"], params["cb3"])
    return act, val


if __name__ == "__main__":
    in_features = 8      # matches AACPolicyNet.build_for_env(8, 4)
    out_actions = 4

    key = jax.random.PRNGKey(0)
    k_x, k_p, k_x2 = jax.random.split(key, 3)
    params = init_params(k_p, in_features, out_actions)
    p_slab = pack_params(params, in_features, out_actions)

    # --- Tiny RL-style batch (N=2), as in the original module usage. ---
    # TODO(synk): in the real RL loop, stack many env timesteps per pallas_call
    # (or dispatch N < ~256 to a plain XLA matmul path) to amortize launch overhead.
    x = jax.random.normal(k_x, (2, in_features), jnp.float32)
    act, val = aac_policy_net_forward(x, p_slab, out_actions=out_actions)
    act, val = jax.block_until_ready((act, val))
    assert act.shape == (2, out_actions)
    assert val.shape == (2, 1)

    m_act, m_val = reference_forward_bf16(x, params)
    assert jnp.allclose(act, m_act, atol=5e-3, rtol=5e-3)
    assert jnp.allclose(val, m_val, atol=5e-3, rtol=5e-3)

    f_act, f_val = reference_forward_f32(x, params)
    assert jnp.allclose(act, f_act, atol=5e-2, rtol=5e-2)
    assert jnp.allclose(val, f_val, atol=5e-2, rtol=5e-2)

    # --- Larger ragged batch: exercises the multi-step ("parallel") grid and the
    # ragged last block (row-independent, padded rows sliced off). ---
    x2 = jax.random.normal(k_x2, (300, in_features), jnp.float32)
    act2, val2 = jax.block_until_ready(
        aac_policy_net_forward(x2, p_slab, out_actions=out_actions))
    m_act2, m_val2 = reference_forward_bf16(x2, params)
    assert act2.shape == (300, out_actions) and val2.shape == (300, 1)
    assert jnp.allclose(act2, m_act2, atol=5e-3, rtol=5e-3)
    assert jnp.allclose(val2, m_val2, atol=5e-3, rtol=5e-3)

    print("KERNEL_OK")
</pallas_src>

<mosaic_0001>
module attributes {stable_mosaic.version = 11 : i64} {
  func.func @_aac_kernel(%arg0: i32, %arg1: memref<8x8xf32, #tpu.memory_space<vmem>>, %arg2: memref<272x128xf32, #tpu.memory_space<vmem>>, %arg3: memref<8x8xf32, #tpu.memory_space<vmem>>) attributes {dimension_semantics = [#tpu.dimension_semantics<parallel>], iteration_bounds = array<i64: 1>, scalar_prefetch = 0 : i64, scratch_operands = 0 : i64, tpu.core_type = #tpu.core_type<tc>, window_params = [{transform_indices = @transform_0, window_bounds = array<i64: 8, 8>}, {pipeline_mode = #tpu.pipeline_mode<synchronous>, transform_indices = @transform_1, window_bounds = array<i64: 272, 128>}, {transform_indices = @transform_2, window_bounds = array<i64: 8, 8>}]} {
    %c0 = arith.constant 0 : index
    %c0_0 = arith.constant 0 : index
    %0 = vector.load %arg1[%c0, %c0_0] : memref<8x8xf32, #tpu.memory_space<vmem>>, vector<8x8xf32>
    %1 = arith.truncf %0 : vector<8x8xf32> to vector<8x8xbf16>
    %c0_1 = arith.constant 0 : index
    %c0_2 = arith.constant 0 : index
    %2 = vector.load %arg2[%c0_1, %c0_2] : memref<272x128xf32, #tpu.memory_space<vmem>>, vector<8x128xf32>
    %3 = arith.truncf %2 : vector<8x128xf32> to vector<8x128xbf16>
    %c8 = arith.constant 8 : index
    %c0_3 = arith.constant 0 : index
    %4 = vector.load %arg2[%c8, %c0_3] : memref<272x128xf32, #tpu.memory_space<vmem>>, vector<128x128xf32>
    %5 = arith.truncf %4 : vector<128x128xf32> to vector<128x128xbf16>
    %c136 = arith.constant 136 : index
    %c0_4 = arith.constant 0 : index
    %6 = vector.load %arg2[%c136, %c0_4] : memref<272x128xf32, #tpu.memory_space<vmem>>, vector<128x128xf32>
    %7 = arith.truncf %6 : vector<128x128xf32> to vector<128x128xbf16>
    %c264 = arith.constant 264 : index
    %c0_5 = arith.constant 0 : index
    %8 = vector.load %arg2[%c264, %c0_5] : memref<272x128xf32, #tpu.memory_space<vmem>>, vector<1x128xf32>
    %c265 = arith.constant 265 : index
    %c0_6 = arith.constant 0 : index
    %9 = vector.load %arg2[%c265, %c0_6] : memref<272x128xf32, #tpu.memory_space<vmem>>, vector<1x128xf32>
    %c266 = arith.constant 266 : index
    %c0_7 = arith.constant 0 : index
    %10 = vector.load %arg2[%c266, %c0_7] : memref<272x128xf32, #tpu.memory_space<vmem>>, vector<1x128xf32>
    %cst = arith.constant dense<0.000000e+00> : vector<8x128xf32>
    %11 = tpu.matmul %1, %3, %cst {dimension_numbers = #tpu.dot_dimension_numbers<[1], [0], [0], [1], [0, 0, 1, 1], [], []>} : vector<8x8xbf16>, vector<8x128xbf16>, vector<8x128xf32> -> vector<8x128xf32>
    %12 = vector.broadcast %8 : vector<1x128xf32> to vector<8x128xf32>
    %13 = arith.addf %11, %12 : vector<8x128xf32>
    %cst_8 = arith.constant 0.000000e+00 : f32
    %14 = vector.broadcast %cst_8 : f32 to vector<8x128xf32>
    %15 = arith.maximumf %13, %14 : vector<8x128xf32>
    %16 = arith.truncf %15 : vector<8x128xf32> to vector<8x128xbf16>
    %cst_9 = arith.constant dense<0.000000e+00> : vector<8x128xf32>
    %17 = tpu.matmul %16, %5, %cst_9 {dimension_numbers = #tpu.dot_dimension_numbers<[1], [0], [0], [1], [0, 0, 1, 1], [], []>} : vector<8x128xbf16>, vector<128x128xbf16>, vector<8x128xf32> -> vector<8x128xf32>
    %18 = vector.broadcast %9 : vector<1x128xf32> to vector<8x128xf32>
    %19 = arith.addf %17, %18 : vector<8x128xf32>
    %cst_10 = arith.constant 0.000000e+00 : f32
    %20 = vector.broadcast %cst_10 : f32 to vector<8x128xf32>
    %21 = arith.maximumf %19, %20 : vector<8x128xf32>
    %22 = arith.truncf %21 : vector<8x128xf32> to vector<8x128xbf16>
    %cst_11 = arith.constant dense<0.000000e+00> : vector<8x128xf32>
    %23 = tpu.matmul %22, %7, %cst_11 {dimension_numbers = #tpu.dot_dimension_numbers<[1], [0], [0], [1], [0, 0, 1, 1], [], []>} : vector<8x128xbf16>, vector<128x128xbf16>, vector<8x128xf32> -> vector<8x128xf32>
    %24 = vector.broadcast %10 : vector<1x128xf32> to vector<8x128xf32>
    %25 = arith.addf %23, %24 : vector<8x128xf32>
    %26 = vector.extract_strided_slice %25 {offsets = [0, 0], sizes = [8, 8], strides = [1, 1]} : vector<8x128xf32> to vector<8x8xf32>
    %c0_12 = arith.constant 0 : index
    %c0_13 = arith.constant 0 : index
    %27 = vector.load %arg3[%c0_12, %c0_13] : memref<8x8xf32, #tpu.memory_space<vmem>>, vector<8x8xf32>
    tpu.vector_store %arg3[%c0_12, %c0_13], %26 {strides = array<i32>} : memref<8x8xf32, #tpu.memory_space<vmem>>, vector<8x8xf32>,
    return
  }
  func.func @transform_0(%arg0: i32) -> (i32, i32) {
    %c0_i32 = arith.constant 0 : i32
    %c0_i32_0 = arith.constant 0 : i32
    return %arg0, %c0_i32 : i32, i32
  }
  func.func @transform_1(%arg0: i32) -> (i32, i32) {
    %c0_i32 = arith.constant 0 : i32
    %c0_i32_0 = arith.constant 0 : i32
    %c0_i32_1 = arith.constant 0 : i32
    return %c0_i32, %c0_i32_0 : i32, i32
  }
  func.func @transform_2(%arg0: i32) -> (i32, i32) {
    %c0_i32 = arith.constant 0 : i32
    %c0_i32_0 = arith.constant 0 : i32
    return %arg0, %c0_i32 : i32, i32
  }
}

</mosaic_0001>

<llo_original>
// kernel: aac_policy_net_forward.1
$region0: #{aac_policy_net_forward.1}
  #allocation0 [shape = 'u32[]', space=smem, size = 0x4, offset = 0x4, fixed_abs, tag = 'smem constant byte address 0x4 - core index']
  #allocation1 [shape = 'u32[144,128]{1,0:T(1,128)}', space=vmem, size = 0x12000, scoped, tag = 'internal scratch']
  %s0 = inlined_call_operand.hbm [shape: f32[2,8], index: 0, kind: input, shape index: {}]
  %s1 = inlined_call_operand.hbm [shape: f32[272,128], index: 1, kind: input, shape index: {}]
  %s2 = inlined_call_operand.vmem [shape: f32[8,8], index: 2, kind: output, shape index: {}]
  %s3 = sld [smem:[#allocation0]]
  $region26: #{aac_policy_net_forward.1} parent=0
    _
  %s5 = ssub.s32 1, %s3
  %s6 = scalar_select 0, %s5, %s3
  $region1: #{aac_policy_net_forward.1} parent=0
    #allocation2 [shape = 'u8[4096]{0}', space=vmem, size = 0x1000, scoped, tag = 'input window, operand 0, single buffered']
    #allocation3 [shape = 's32[1]{0}', space=sflag, size = 0x4, scoped, tag = 'scoped memory for aac_policy_net_forward.1']
    #allocation4 [shape = 'u8[139264]{0}', space=vmem, size = 0x22000, scoped, tag = 'input window, operand 1, single buffered']
    #allocation5 [shape = 's32[1]{0}', space=sflag, size = 0x4, scoped, tag = 'scoped memory for aac_policy_net_forward.1']
    %7 = vsyncpa [#allocation3], 0
    %8 = vsyncpa [#allocation5], 0
    // Predicated region
    $region2: #{aac_policy_net_forward.1} parent=1 // pred_check
      _
    $region3: #{aac_policy_net_forward.1} parent=1 // pred_check_branch
      %10 = sbr.rel (0) target = $region5
    $region4: #{aac_policy_net_forward.1} parent=1 // pred_region
      %s12 = ssub.s32 128, 32
      %13 = vsyncadd [#allocation3], %s12
      %s14 = sshll.u32 [#allocation2], 4
      %s15 = int_to_ptr.vmem [resolvable:$true] %s14
      %20 = dma.hbm_to_vmem [thread:$0]  %s0, 32, %s15, [#allocation3], 32, 32, 2
    $region5: #{aac_policy_net_forward.1} parent=1 // pred_fallthru
      _
    // Predicated region
    $region6: #{aac_policy_net_forward.1} parent=1 // pred_check
      _
    $region7: #{aac_policy_net_forward.1} parent=1 // pred_check_branch
      %22 = sbr.rel (0) target = $region9
    $region8: #{aac_policy_net_forward.1} parent=1 // pred_region
      %s24 = ssub.s32 4352, 4352
      %25 = vsyncadd [#allocation5], %s24
      %s26 = sshll.u32 [#allocation4], 4
      %s27 = int_to_ptr.vmem [resolvable:$true] %s26
      %32 = dma.hbm_to_vmem [thread:$0]  %s1, 4352, %s27, [#allocation5], 128, 128, 8
    $region9: #{aac_policy_net_forward.1} parent=1 // pred_fallthru
      _
    // Predicated region
    $region10: #{aac_policy_net_forward.1} parent=1 // pred_check
      _
    $region11: #{aac_policy_net_forward.1} parent=1 // pred_check_branch
      %34 = sbr.rel (0) target = $region13
    $region12: #{aac_policy_net_forward.1} parent=1 // pred_region
      %35 = dma.done [#allocation3], 128
    $region13: #{aac_policy_net_forward.1} parent=1 // pred_fallthru
      _
    // Predicated region
    $region14: #{aac_policy_net_forward.1} parent=1 // pred_check
      _
    $region15: #{aac_policy_net_forward.1} parent=1 // pred_check_branch
      %37 = sbr.rel (0) target = $region17
    $region16: #{aac_policy_net_forward.1} parent=1 // pred_region
      %38 = dma.done [#allocation5], 4352
    $region17: #{aac_policy_net_forward.1} parent=1 // pred_fallthru
      _
    %v40 = vld [vmem:[#allocation2] sm:$0xff]
    %v41 = vpack.c.bf16 %v40, %v40
    %v42 = vld [vmem:[#allocation4] sm:$0xff]
    %v43 = vpack.c.bf16 %v42, %v42
    %v44 = vld [vmem:[#allocation4 + $0x8] sm:$0xff]
    %v45 = vld [vmem:[#allocation4 + $0x10] sm:$0xff]
    %v46 = vld [vmem:[#allocation4 + $0x18] sm:$0xff]
    %v47 = vld [vmem:[#allocation4 + $0x20] sm:$0xff]
    %v48 = vld [vmem:[#allocation4 + $0x28] sm:$0xff]
    %v49 = vld [vmem:[#allocation4 + $0x30] sm:$0xff]
    %v50 = vld [vmem:[#allocation4 + $0x38] sm:$0xff]
    %v51 = vld [vmem:[#allocation4 + $0x40] sm:$0xff]
    %v52 = vld [vmem:[#allocation4 + $0x48] sm:$0xff]
    %v53 = vld [vmem:[#allocation4 + $0x50] sm:$0xff]
    %v54 = vld [vmem:[#allocation4 + $0x58] sm:$0xff]
    %v55 = vld [vmem:[#allocation4 + $0x60] sm:$0xff]
    %v56 = vld [vmem:[#allocation4 + $0x68] sm:$0xff]
    %v57 = vld [vmem:[#allocation4 + $0x70] sm:$0xff]
    %v58 = vld [vmem:[#allocation4 + $0x78] sm:$0xff]
    %v59 = vld [vmem:[#allocation4 + $0x80] sm:$0xff]
    %v60 = vpack.c.bf16 %v45, %v44
    %v61 = vpack.c.bf16 %v47, %v46
    %v62 = vpack.c.bf16 %v49, %v48
    %v63 = vpack.c.bf16 %v51, %v50
    %v64 = vpack.c.bf16 %v53, %v52
    %v65 = vpack.c.bf16 %v55, %v54
    %v66 = vpack.c.bf16 %v57, %v56
    %v67 = vpack.c.bf16 %v59, %v58
    %v68 = vld [vmem:[#allocation4 + $0x88] sm:$0xff]
    %v69 = vld [vmem:[#allocation4 + $0x90] sm:$0xff]
    %v70 = vld [vmem:[#allocation4 + $0x98] sm:$0xff]
    %v71 = vld [vmem:[#allocation4 + $0xa0] sm:$0xff]
    %v72 = vld [vmem:[#allocation4 + $0xa8] sm:$0xff]
    %v73 = vld [vmem:[#allocation4 + $0xb0] sm:$0xff]
    %v74 = vld [vmem:[#allocation4 + $0xb8] sm:$0xff]
    %v75 = vld [vmem:[#allocation4 + $0xc0] sm:$0xff]
    %v76 = vld [vmem:[#allocation4 + $0xc8] sm:$0xff]
    %v77 = vld [vmem:[#allocation4 + $0xd0] sm:$0xff]
    %v78 = vld [vmem:[#allocation4 + $0xd8] sm:$0xff]
    %v79 = vld [vmem:[#allocation4 + $0xe0] sm:$0xff]
    %v80 = vld [vmem:[#allocation4 + $0xe8] sm:$0xff]
    %v81 = vld [vmem:[#allocation4 + $0xf0] sm:$0xff]
    %v82 = vld [vmem:[#allocation4 + $0xf8] sm:$0xff]
    %v83 = vld [vmem:[#allocation4 + $0x100] sm:$0xff]
    %v84 = vpack.c.bf16 %v69, %v68
    %v85 = vpack.c.bf16 %v71, %v70
    %v86 = vpack.c.bf16 %v73, %v72
    %v87 = vpack.c.bf16 %v75, %v74
    %v88 = vpack.c.bf16 %v77, %v76
    %v89 = vpack.c.bf16 %v79, %v78
    %v90 = vpack.c.bf16 %v81, %v80
    %v91 = vpack.c.bf16 %v83, %v82
    %v92 = vld [vmem:[#allocation4 + $0x108] sm:$0x1]
    %v93 = vld [vmem:[#allocation4 + $0x109] sm:$0x1]
    %v94 = vld [vmem:[#allocation4 + $0x10a] sm:$0x1]
    %v95 = vlaneseq
    %v96 = vshrl.u32 %v95, 7
    %v97 = vsub.s32 0, %v96
    %v98 = vrot.slane %v92, %v97
    %vm99 = vcmask 64512
    %v101 = vsel %vm99, %v41, 0
    %vm103 = vcmask 1043456
    %v105 = vsel %vm103, %v43, 0
    %107 = vmatprep.subr.bf16.mxu0 0
    %108 = vmatpush1.bf16.msra.mxu0 0
    %109 = vmatprep.subr.bf16.mxu0 0
    %110 = vmatpush1.bf16.msra.mxu0 0
    %111 = vmatprep.subr.bf16.mxu0 0
    %112 = vmatpush1.bf16.msra.mxu0 0
    %113 = vmatprep.subr.bf16.mxu0 0
    %114 = vmatpush1.bf16.msra.mxu0 0
    %115 = vmatprep.subr.bf16.mxu0 0
    %116 = vmatpush1.bf16.msra.mxu0 0
    %117 = vmatprep.subr.bf16.mxu0 0
    %118 = vmatpush1.bf16.msra.mxu0 0
    %119 = vmatprep.subr.bf16.mxu0 0
    %120 = vmatpush1.bf16.msra.mxu0 0
    %121 = vmatprep.subr.bf16.mxu0 0
    %122 = vmatpush1.bf16.msra.mxu0 %v105
    %123 = vmatprep.subr.bf16.mxu0 0
    %124 = vmatpush2.bf16.msra.mxu0 0
    %125 = vmatprep.subr.bf16.mxu0 0
    %126 = vmatpush2.bf16.msra.mxu0 0
    %127 = vmatprep.subr.bf16.mxu0 0
    %128 = vmatpush2.bf16.msra.mxu0 0
    %129 = vmatprep.subr.bf16.mxu0 0
    %130 = vmatpush2.bf16.msra.mxu0 0
    %131 = vmatprep.subr.bf16.mxu0 0
    %132 = vmatpush2.bf16.msra.mxu0 0
    %133 = vmatprep.subr.bf16.mxu0 0
    %134 = vmatpush2.bf16.msra.mxu0 0
    %135 = vmatprep.subr.bf16.mxu0 0
    %136 = vmatpush2.bf16.msra.mxu0 0
    %137 = vmatprep.subr.bf16.mxu0 0
    %138 = vmatpush2.bf16.msra.mxu0 0
    %139 = vmatprep.mubr.bf16.mxu0 0
    %140 = vmatmul.mubr.bf16.gmra.mxu0 %v101
    %v141 = vpop.f32.mrf.mxu0
    %v142 = vadd.f32 %v98, %v141
    %v143 = vpop.f32.mrf.mxu0
    %v144 = vpop.f32.mrf.mxu0
    %v145 = vpop.f32.mrf.mxu0
    %146 = vdwg.mxu0
    %v147 = vmax.f32 %v142, 0.0
    %v148 = vpack.c.bf16 %v147, %v147
    %v149 = vlaneseq
    %v150 = vshrl.u32 %v149, 7
    %v151 = vsub.s32 0, %v150
    %v152 = vrot.slane %v93, %v151
    %153 = vmatprep.subr.bf16.mxu0 0
    %154 = vmatpush1.bf16.msra.mxu0 %v67
    %155 = vmatprep.subr.bf16.mxu0 0
    %156 = vmatpush1.bf16.msra.mxu0 %v66
    %157 = vmatprep.subr.bf16.mxu0 0
    %158 = vmatpush1.bf16.msra.mxu0 %v65
    %159 = vmatprep.subr.bf16.mxu0 0
    %160 = vmatpush1.bf16.msra.mxu0 %v64
    %161 = vmatprep.subr.bf16.mxu0 0
    %162 = vmatpush1.bf16.msra.mxu0 %v63
    %163 = vmatprep.subr.bf16.mxu0 0
    %164 = vmatpush1.bf16.msra.mxu0 %v62
    %165 = vmatprep.subr.bf16.mxu0 0
    %166 = vmatpush1.bf16.msra.mxu0 %v61
    %167 = vmatprep.subr.bf16.mxu0 0
    %168 = vmatpush1.bf16.msra.mxu0 %v60
    %169 = vmatprep.subr.bf16.mxu0 0
    %170 = vmatpush2.bf16.msra.mxu0 0
    %171 = vmatprep.subr.bf16.mxu0 0
    %172 = vmatpush2.bf16.msra.mxu0 0
    %173 = vmatprep.subr.bf16.mxu0 0
    %174 = vmatpush2.bf16.msra.mxu0 0
    %175 = vmatprep.subr.bf16.mxu0 0
    %176 = vmatpush2.bf16.msra.mxu0 0
    %177 = vmatprep.subr.bf16.mxu0 0
    %178 = vmatpush2.bf16.msra.mxu0 0
    %179 = vmatprep.subr.bf16.mxu0 0
    %180 = vmatpush2.bf16.msra.mxu0 0
    %181 = vmatprep.subr.bf16.mxu0 0
    %182 = vmatpush2.bf16.msra.mxu0 0
    %183 = vmatprep.subr.bf16.mxu0 0
    %184 = vmatpush2.bf16.msra.mxu0 0
    %185 = vmatprep.mubr.bf16.mxu0 0
    %186 = vmatmul.mubr.bf16.gmra.mxu0 %v148
    %v187 = vpop.f32.mrf.mxu0
    %v188 = vadd.f32 %v152, %v187
    %v189 = vpop.f32.mrf.mxu0
    %v190 = vpop.f32.mrf.mxu0
    %v191 = vpop.f32.mrf.mxu0
    %192 = vdwg.mxu0
    %v193 = vmax.f32 %v188, 0.0
    %v194 = vpack.c.bf16 %v193, %v193
    %v195 = vlaneseq
    %v196 = vshrl.u32 %v195, 7
    %v197 = vsub.s32 0, %v196
    %v198 = vrot.slane %v94, %v197
    %199 = vmatprep.subr.bf16.mxu0 0
    %200 = vmatpush1.bf16.msra.mxu0 %v91
    %201 = vmatprep.subr.bf16.mxu0 0
    %202 = vmatpush1.bf16.msra.mxu0 %v90
    %203 = vmatprep.subr.bf16.mxu0 0
    %204 = vmatpush1.bf16.msra.mxu0 %v89
    %205 = vmatprep.subr.bf16.mxu0 0
    %206 = vmatpush1.bf16.msra.mxu0 %v88
    %207 = vmatprep.subr.bf16.mxu0 0
    %208 = vmatpush1.bf16.msra.mxu0 %v87
    %209 = vmatprep.subr.bf16.mxu0 0
    %210 = vmatpush1.bf16.msra.mxu0 %v86
    %211 = vmatprep.subr.bf16.mxu0 0
    %212 = vmatpush1.bf16.msra.mxu0 %v85
    %213 = vmatprep.subr.bf16.mxu0 0
    %214 = vmatpush1.bf16.msra.mxu0 %v84
    %215 = vmatprep.subr.bf16.mxu0 0
    %216 = vmatpush2.bf16.msra.mxu0 0
    %217 = vmatprep.subr.bf16.mxu0 0
    %218 = vmatpush2.bf16.msra.mxu0 0
    %219 = vmatprep.subr.bf16.mxu0 0
    %220 = vmatpush2.bf16.msra.mxu0 0
    %221 = vmatprep.subr.bf16.mxu0 0
    %222 = vmatpush2.bf16.msra.mxu0 0
    %223 = vmatprep.subr.bf16.mxu0 0
    %224 = vmatpush2.bf16.msra.mxu0 0
    %225 = vmatprep.subr.bf16.mxu0 0
    %226 = vmatpush2.bf16.msra.mxu0 0
    %227 = vmatprep.subr.bf16.mxu0 0
    %228 = vmatpush2.bf16.msra.mxu0 0
    %229 = vmatprep.subr.bf16.mxu0 0
    %230 = vmatpush2.bf16.msra.mxu0 0
    %231 = vmatprep.mubr.bf16.mxu0 0
    %232 = vmatmul.mubr.bf16.gmra.mxu0 %v194
    %v233 = vpop.f32.mrf.mxu0
    %v234 = vadd.f32 %v198, %v233
    %v235 = vpop.f32.mrf.mxu0
    %v236 = vpop.f32.mrf.mxu0
    %v237 = vpop.f32.mrf.mxu0
    %238 = vdwg.mxu0
    %239 = vst.msk [vmem:[%s2] sm:$0xff] %vm99, %v234
    // Predicated region
    $region18: #{aac_policy_net_forward.1} parent=1 // pred_check
      _
    $region19: #{aac_policy_net_forward.1} parent=1 // pred_check_branch
      %241 = sbr.rel (0) target = $region21
    $region20: #{aac_policy_net_forward.1} parent=1 // pred_region
      _
    $region21: #{aac_policy_net_forward.1} parent=1 // pred_fallthru
      _
    // Predicated region
    $region22: #{aac_policy_net_forward.1} parent=1 // pred_check
      _
    $region23: #{aac_policy_net_forward.1} parent=1 // pred_check_branch
      %243 = sbr.rel (0) target = $region25
    $region24: #{aac_policy_net_forward.1} parent=1 // pred_region
      _
    $region25: #{aac_policy_net_forward.1} parent=1 // pred_fallthru
      _
    %244 = vsyncpa [#allocation3], 1
    %245 = vsyncpa [#allocation5], 1

</llo_original>
